<compile_context>
chip_gen: v6e
topology: v6e:2x2x1
jax: 0.10.0
libtpu: 0.0.40
codegen_flags: <defaults>
</compile_context>

<pallas_src>
import functools

import jax
import jax.numpy as jnp
import numpy as np
from jax.experimental import pallas as pl
from jax.experimental.pallas import tpu as pltpu


def gcb_kernel(x_ref, wk_ref, bk_ref, w1_ref, b1_ref, gamma_ref, beta_ref,
               w2_ref, b2_ref, o_ref, *, hw_valid, batch_block):
    """One grid step: `batch_block` batch elements; x_ref is (bt, C, HW_pad)."""
    hw_pad = x_ref.shape[-1]

    xf = x_ref[...].astype(jnp.float32)                 # (bt, C, HWp)
    wk = wk_ref[...].astype(jnp.float32)                # (1, C, 1)

    # ---- Conv_key (1x1 conv C -> 1): VPU multiply + channel (sublane) reduce.
    logits = jnp.sum(xf * wk, axis=1, keepdims=True) + bk_ref[0, 0]   # (bt, 1, HWp)

    # ---- softmax over the spatial axis (padded lanes masked out) ------------
    m = jnp.max(logits, axis=-1, keepdims=True)                       # (bt, 1, 1)
    e = jnp.exp(logits - m)                                           # (bt, 1, HWp)
    if hw_valid != hw_pad:
        lane = jax.lax.broadcasted_iota(jnp.int32, (1, 1, hw_pad), 2)
        e = jnp.where(lane < hw_valid, e, 0.0)
    denom = jnp.sum(e, axis=-1, keepdims=True)                        # (bt, 1, 1)
    inv_denom = pl.reciprocal(denom, approx=True)                     # EUP slot

    # ---- global context: query @ softmax(key) as a lane multiply-reduce.
    # Fold the softmax normalization into the tiny (bt, C, 1) context instead
    # of rescaling the (bt, 1, HWp) key row.
    ctx = jnp.sum(xf * e, axis=-1, keepdims=True) * inv_denom         # (bt, C, 1)

    # ---- Conv_value on the 1x1 context "image" == small dense layers.
    # Done per batch element (static unroll, bt <= 16) so every intermediate
    # stays 2-D with channels on the sublane axis (no relayouts needed for the
    # broadcast residual add at the end).
    w1 = w1_ref[...]
    b1 = b1_ref[...]
    g = gamma_ref[...]
    bta = beta_ref[...]
    w2 = w2_ref[...]
    b2 = b2_ref[...]
    for b in range(batch_block):
        cb = ctx[b]                                                   # (C, 1)
        v1 = jnp.dot(w1, cb, preferred_element_type=jnp.float32) + b1  # (C_out, 1)
        # LayerNorm([C_out, 1, 1]) -> normalize over the C_out axis.
        mu = jnp.mean(v1)
        var = jnp.mean((v1 - mu) ** 2)
        ln = (v1 - mu) * jax.lax.rsqrt(var + 1e-5) * g + bta
        r = jnp.maximum(ln, 0.0)
        v2 = jnp.dot(w2, r, preferred_element_type=jnp.float32) + b2   # (C, 1)
        # residual add: reload this element from VMEM so `xf` can retire early.
        o_ref[b] = (x_ref[b].astype(jnp.float32) + v2).astype(o_ref.dtype)


def global_context_block(x, params, *, batch_block_cap=16):
    """x: (B, C, H, W) float32 NCHW.  params: dict of weights (see init_params)."""
    B, C, H, W = x.shape
    HW = H * W
    HW_pad = ((HW + 127) // 128) * 128            # lane-dense spatial axis
    C_out = params["w1"].shape[0]

    xr = x.reshape(B, C, HW)
    if HW_pad != HW:
        xr = jnp.pad(xr, ((0, 0), (0, 0), (0, HW_pad - HW)))

    # Batch block: largest divisor of B (capped) whose pipelined footprint
    # 2x(in block) + 2x(out block) = 4 * bt*C*HW_pad*4B stays under ~24 MiB.
    per_elem_bytes = C * HW_pad * 4
    block_budget = 6 * 1024 * 1024                # per buffer; x4 when pipelined
    bt = 1
    for d in range(1, min(B, batch_block_cap) + 1):
        if B % d == 0 and d * per_elem_bytes <= block_budget:
            bt = d
    # NOTE: if a single (C, HW_pad) slab exceeds the budget we fall back to
    # bt=1; splitting HW with an online-softmax accumulator would be the next
    # step for very large feature maps (not needed at these shapes).

    wk3 = params["wk"].reshape(1, C, 1)           # broadcasts over (bt, C, HWp)

    kernel = functools.partial(gcb_kernel, hw_valid=HW, batch_block=bt)
    out = pl.pallas_call(
        kernel,
        out_shape=jax.ShapeDtypeStruct((B, C, HW_pad), x.dtype),
        grid_spec=pltpu.PrefetchScalarGridSpec(
            num_scalar_prefetch=0,
            grid=(B // bt,),
            in_specs=[
                pl.BlockSpec((bt, C, HW_pad), lambda i: (i, 0, 0)),   # x slab
                pl.BlockSpec((1, C, 1), lambda i: (0, 0, 0)),         # Conv_key weight
                pl.BlockSpec(memory_space=pltpu.MemorySpace.SMEM),    # Conv_key bias (scalar)
                pl.BlockSpec((C_out, C), lambda i: (0, 0)),           # Conv_value[0] weight
                pl.BlockSpec((C_out, 1), lambda i: (0, 0)),           # Conv_value[0] bias
                pl.BlockSpec((C_out, 1), lambda i: (0, 0)),           # LayerNorm gamma
                pl.BlockSpec((C_out, 1), lambda i: (0, 0)),           # LayerNorm beta
                pl.BlockSpec((C, C_out), lambda i: (0, 0)),           # Conv_value[3] weight
                pl.BlockSpec((C, 1), lambda i: (0, 0)),               # Conv_value[3] bias
            ],
            out_specs=pl.BlockSpec((bt, C, HW_pad), lambda i: (i, 0, 0)),
        ),
        compiler_params=pltpu.CompilerParams(
            # Independent batch blocks -> megacore / v7x dual-TC sharding.
            dimension_semantics=("parallel",),
            # Raise v5e's 16 MiB default scoped VMEM; 32 MiB is the default on
            # v6e/v7x and well inside every generation's physical VMEM.
            vmem_limit_bytes=32 * 1024 * 1024,
        ),
    )(xr, wk3, params["bk"], params["w1"], params["b1"],
      params["gamma"], params["beta"], params["w2"], params["b2"])

    if HW_pad != HW:
        out = out[:, :, :HW]
    return out.reshape(B, C, H, W)


def init_params(key, in_channels, scale=16):
    c = in_channels
    c_out = c // scale
    ks = jax.random.split(key, 8)
    return {
        # Conv_key: Conv2d(C, 1, 1)  -> weight (1, C), bias (1, 1)
        "wk": jax.random.normal(ks[0], (1, c), jnp.float32) * 0.1,
        "bk": jax.random.normal(ks[1], (1, 1), jnp.float32) * 0.1,
        # Conv_value[0]: Conv2d(C, C_out, 1) -> weight (C_out, C), bias (C_out, 1)
        "w1": jax.random.normal(ks[2], (c_out, c), jnp.float32) * 0.1,
        "b1": jax.random.normal(ks[3], (c_out, 1), jnp.float32) * 0.1,
        # LayerNorm([C_out, 1, 1])
        "gamma": 1.0 + jax.random.normal(ks[4], (c_out, 1), jnp.float32) * 0.05,
        "beta": jax.random.normal(ks[5], (c_out, 1), jnp.float32) * 0.05,
        # Conv_value[3]: Conv2d(C_out, C, 1) -> weight (C, C_out), bias (C, 1)
        "w2": jax.random.normal(ks[6], (c, c_out), jnp.float32) * 0.1,
        "b2": jax.random.normal(ks[7], (c, 1), jnp.float32) * 0.1,
    }


def reference(x, params):
    """Pure-JAX re-implementation of the PyTorch forward, for checking."""
    b, c, h, w = x.shape
    xr = x.reshape(b, c, h * w)
    logits = jnp.einsum("oc,bcn->bn", params["wk"], xr) + params["bk"][0, 0]
    key = jax.nn.softmax(logits, axis=-1)                       # softmax over HW
    ctx = jnp.einsum("bcn,bn->bc", xr, key)                     # (b, c)
    v1 = ctx @ params["w1"].T + params["b1"][:, 0]              # (b, c_out)
    mu = v1.mean(-1, keepdims=True)
    var = ((v1 - mu) ** 2).mean(-1, keepdims=True)
    ln = (v1 - mu) / jnp.sqrt(var + 1e-5) * params["gamma"][:, 0] + params["beta"][:, 0]
    r = jnp.maximum(ln, 0.0)
    v2 = r @ params["w2"].T + params["b2"][:, 0]                # (b, c)
    return x + v2[:, :, None, None]


if __name__ == "__main__":
    def check(B, C, H, W, scale):
        key = jax.random.PRNGKey(0)
        kx, kp = jax.random.split(key)
        x = jax.random.normal(kx, (B, C, H, W), jnp.float32)
        params = init_params(kp, C, scale=scale)
        out = jax.block_until_ready(global_context_block(x, params))
        ref = reference(x, params)
        # approx-reciprocal softmax normalization -> slightly looser tolerance
        np.testing.assert_allclose(np.asarray(out), np.asarray(ref),
                                   rtol=2e-3, atol=2e-3)

    check(B=2, C=32, H=16, W=16, scale=16)   # lane-aligned spatial axis (HW=256)
    check(B=2, C=64, H=7, W=7, scale=16)     # padded spatial axis (HW=49 -> 128)
    print("KERNEL_OK")
</pallas_src>

<mosaic_0001>
module attributes {stable_mosaic.version = 11 : i64} {
  func.func @gcb_kernel(%arg0: i32, %arg1: memref<2x32x256xf32, #tpu.memory_space<vmem>>, %arg2: memref<1x32x1xf32, #tpu.memory_space<vmem>>, %arg3: memref<1x1xf32, #tpu.memory_space<smem>>, %arg4: memref<2x32xf32, #tpu.memory_space<vmem>>, %arg5: memref<2x1xf32, #tpu.memory_space<vmem>>, %arg6: memref<2x1xf32, #tpu.memory_space<vmem>>, %arg7: memref<2x1xf32, #tpu.memory_space<vmem>>, %arg8: memref<32x2xf32, #tpu.memory_space<vmem>>, %arg9: memref<32x1xf32, #tpu.memory_space<vmem>>, %arg10: memref<2x32x256xf32, #tpu.memory_space<vmem>>) attributes {dimension_semantics = [#tpu.dimension_semantics<parallel>], iteration_bounds = array<i64: 1>, scalar_prefetch = 0 : i64, scratch_operands = 0 : i64, tpu.core_type = #tpu.core_type<tc>, window_params = [{transform_indices = @transform_0, window_bounds = array<i64: 2, 32, 256>}, {pipeline_mode = #tpu.pipeline_mode<synchronous>, transform_indices = @transform_1, window_bounds = array<i64: 1, 32, 1>}, {transform_indices = @transform_2, window_bounds = array<i64: 1, 1>}, {pipeline_mode = #tpu.pipeline_mode<synchronous>, transform_indices = @transform_3, window_bounds = array<i64: 2, 32>}, {pipeline_mode = #tpu.pipeline_mode<synchronous>, transform_indices = @transform_4, window_bounds = array<i64: 2, 1>}, {pipeline_mode = #tpu.pipeline_mode<synchronous>, transform_indices = @transform_5, window_bounds = array<i64: 2, 1>}, {pipeline_mode = #tpu.pipeline_mode<synchronous>, transform_indices = @transform_6, window_bounds = array<i64: 2, 1>}, {pipeline_mode = #tpu.pipeline_mode<synchronous>, transform_indices = @transform_7, window_bounds = array<i64: 32, 2>}, {pipeline_mode = #tpu.pipeline_mode<synchronous>, transform_indices = @transform_8, window_bounds = array<i64: 32, 1>}, {transform_indices = @transform_9, window_bounds = array<i64: 2, 32, 256>}]} {
    %c0 = arith.constant 0 : index
    %c0_0 = arith.constant 0 : index
    %c0_1 = arith.constant 0 : index
    %0 = vector.load %arg1[%c0, %c0_0, %c0_1] : memref<2x32x256xf32, #tpu.memory_space<vmem>>, vector<2x32x256xf32>
    %c0_2 = arith.constant 0 : index
    %c0_3 = arith.constant 0 : index
    %c0_4 = arith.constant 0 : index
    %1 = vector.load %arg2[%c0_2, %c0_3, %c0_4] : memref<1x32x1xf32, #tpu.memory_space<vmem>>, vector<1x32x1xf32>
    %2 = vector.broadcast %1 : vector<1x32x1xf32> to vector<2x32x256xf32>
    %3 = arith.mulf %0, %2 : vector<2x32x256xf32>
    %cst = arith.constant dense<0.000000e+00> : vector<2x256xf32>
    %4 = vector.multi_reduction <add>, %3, %cst [1] : vector<2x32x256xf32> to vector<2x256xf32>
    %5 = vector.shape_cast %4 : vector<2x256xf32> to vector<2x1x256xf32>
    %c0_5 = arith.constant 0 : index
    %c0_6 = arith.constant 0 : index
    %6 = memref.load %arg3[%c0_5, %c0_6] : memref<1x1xf32, #tpu.memory_space<smem>>
    %7 = vector.broadcast %6 : f32 to vector<2x1x256xf32>
    %8 = arith.addf %5, %7 : vector<2x1x256xf32>
    %cst_7 = arith.constant dense<0xFF800000> : vector<2x1xf32>
    %9 = vector.multi_reduction <maximumf>, %8, %cst_7 [2] : vector<2x1x256xf32> to vector<2x1xf32>
    %10 = vector.shape_cast %9 : vector<2x1xf32> to vector<2x1x1xf32>
    %11 = vector.broadcast %10 : vector<2x1x1xf32> to vector<2x1x256xf32>
    %12 = arith.subf %8, %11 : vector<2x1x256xf32>
    %13 = math.exp %12 : vector<2x1x256xf32>
    %cst_8 = arith.constant dense<0.000000e+00> : vector<2x1xf32>
    %14 = vector.multi_reduction <add>, %13, %cst_8 [2] : vector<2x1x256xf32> to vector<2x1xf32>
    %15 = vector.shape_cast %14 : vector<2x1xf32> to vector<2x1x1xf32>
    %16 = tpu.reciprocal %15 {approx = true} : vector<2x1x1xf32> -> vector<2x1x1xf32>
    %17 = vector.broadcast %13 : vector<2x1x256xf32> to vector<2x32x256xf32>
    %18 = arith.mulf %0, %17 : vector<2x32x256xf32>
    %cst_9 = arith.constant dense<0.000000e+00> : vector<2x32xf32>
    %19 = vector.multi_reduction <add>, %18, %cst_9 [2] : vector<2x32x256xf32> to vector<2x32xf32>
    %20 = vector.shape_cast %19 : vector<2x32xf32> to vector<2x32x1xf32>
    %21 = vector.broadcast %16 : vector<2x1x1xf32> to vector<2x32x1xf32>
    %22 = arith.mulf %20, %21 : vector<2x32x1xf32>
    %c0_10 = arith.constant 0 : index
    %c0_11 = arith.constant 0 : index
    %23 = vector.load %arg4[%c0_10, %c0_11] : memref<2x32xf32, #tpu.memory_space<vmem>>, vector<2x32xf32>
    %c0_12 = arith.constant 0 : index
    %c0_13 = arith.constant 0 : index
    %24 = vector.load %arg5[%c0_12, %c0_13] : memref<2x1xf32, #tpu.memory_space<vmem>>, vector<2x1xf32>
    %c0_14 = arith.constant 0 : index
    %c0_15 = arith.constant 0 : index
    %25 = vector.load %arg6[%c0_14, %c0_15] : memref<2x1xf32, #tpu.memory_space<vmem>>, vector<2x1xf32>
    %c0_16 = arith.constant 0 : index
    %c0_17 = arith.constant 0 : index
    %26 = vector.load %arg7[%c0_16, %c0_17] : memref<2x1xf32, #tpu.memory_space<vmem>>, vector<2x1xf32>
    %c0_18 = arith.constant 0 : index
    %c0_19 = arith.constant 0 : index
    %27 = vector.load %arg8[%c0_18, %c0_19] : memref<32x2xf32, #tpu.memory_space<vmem>>, vector<32x2xf32>
    %c0_20 = arith.constant 0 : index
    %c0_21 = arith.constant 0 : index
    %28 = vector.load %arg9[%c0_20, %c0_21] : memref<32x1xf32, #tpu.memory_space<vmem>>, vector<32x1xf32>
    %29 = vector.extract_strided_slice %22 {offsets = [0, 0, 0], sizes = [1, 32, 1], strides = [1, 1, 1]} : vector<2x32x1xf32> to vector<1x32x1xf32>
    %30 = vector.shape_cast %29 : vector<1x32x1xf32> to vector<32x1xf32>
    %cst_22 = arith.constant dense<0.000000e+00> : vector<2x1xf32>
    %31 = tpu.matmul %23, %30, %cst_22 {dimension_numbers = #tpu.dot_dimension_numbers<[1], [0], [0], [1], [0, 0, 1, 1], [], []>} : vector<2x32xf32>, vector<32x1xf32>, vector<2x1xf32> -> vector<2x1xf32>
    %32 = arith.addf %31, %24 : vector<2x1xf32>
    %33 = vector.shape_cast %32 : vector<2x1xf32> to vector<1x2x1xf32>
    %cst_23 = arith.constant dense<0.000000e+00> : vector<1xf32>
    %34 = vector.multi_reduction <add>, %33, %cst_23 [1, 2] : vector<1x2x1xf32> to vector<1xf32>
    %35 = vector.shape_cast %34 : vector<1xf32> to vector<1x1x1xf32>
    %36 = vector.extract %35[0, 0, 0] : f32 from vector<1x1x1xf32>
    %cst_24 = arith.constant 2.000000e+00 : f32
    %37 = arith.divf %36, %cst_24 : f32
    %38 = vector.broadcast %37 : f32 to vector<2x1xf32>
    %39 = arith.subf %32, %38 : vector<2x1xf32>
    %40 = arith.mulf %39, %39 : vector<2x1xf32>
    %41 = vector.shape_cast %40 : vector<2x1xf32> to vector<1x2x1xf32>
    %cst_25 = arith.constant dense<0.000000e+00> : vector<1xf32>
    %42 = vector.multi_reduction <add>, %41, %cst_25 [1, 2] : vector<1x2x1xf32> to vector<1xf32>
    %43 = vector.shape_cast %42 : vector<1xf32> to vector<1x1x1xf32>
    %44 = vector.extract %43[0, 0, 0] : f32 from vector<1x1x1xf32>
    %cst_26 = arith.constant 2.000000e+00 : f32
    %45 = arith.divf %44, %cst_26 : f32
    %46 = vector.broadcast %37 : f32 to vector<2x1xf32>
    %47 = arith.subf %32, %46 : vector<2x1xf32>
    %cst_27 = arith.constant 9.99999974E-6 : f32
    %48 = arith.addf %45, %cst_27 : f32
    %49 = math.rsqrt %48 : f32
    %50 = vector.broadcast %49 : f32 to vector<2x1xf32>
    %51 = arith.mulf %47, %50 : vector<2x1xf32>
    %52 = arith.mulf %51, %25 : vector<2x1xf32>
    %53 = arith.addf %52, %26 : vector<2x1xf32>
    %cst_28 = arith.constant 0.000000e+00 : f32
    %54 = vector.broadcast %cst_28 : f32 to vector<2x1xf32>
    %55 = arith.maximumf %53, %54 : vector<2x1xf32>
    %cst_29 = arith.constant dense<0.000000e+00> : vector<32x1xf32>
    %56 = tpu.matmul %27, %55, %cst_29 {dimension_numbers = #tpu.dot_dimension_numbers<[1], [0], [0], [1], [0, 0, 1, 1], [], []>} : vector<32x2xf32>, vector<2x1xf32>, vector<32x1xf32> -> vector<32x1xf32>
    %57 = arith.addf %56, %28 : vector<32x1xf32>
    %c0_30 = arith.constant 0 : index
    %c0_31 = arith.constant 0 : index
    %c0_32 = arith.constant 0 : index
    %58 = vector.load %arg1[%c0_30, %c0_31, %c0_32] : memref<2x32x256xf32, #tpu.memory_space<vmem>>, vector<1x32x256xf32>
    %59 = vector.shape_cast %58 : vector<1x32x256xf32> to vector<32x256xf32>
    %60 = vector.broadcast %57 : vector<32x1xf32> to vector<32x256xf32>
    %61 = arith.addf %59, %60 : vector<32x256xf32>
    %c0_33 = arith.constant 0 : index
    %c0_34 = arith.constant 0 : index
    %c0_35 = arith.constant 0 : index
    %62 = vector.load %arg10[%c0_33, %c0_34, %c0_35] : memref<2x32x256xf32, #tpu.memory_space<vmem>>, vector<1x32x256xf32>
    %63 = vector.shape_cast %62 : vector<1x32x256xf32> to vector<32x256xf32>
    %64 = vector.shape_cast %61 : vector<32x256xf32> to vector<1x32x256xf32>
    tpu.vector_store %arg10[%c0_33, %c0_34, %c0_35], %64 {strides = array<i32>} : memref<2x32x256xf32, #tpu.memory_space<vmem>>, vector<1x32x256xf32>,
    %65 = vector.extract_strided_slice %22 {offsets = [1, 0, 0], sizes = [1, 32, 1], strides = [1, 1, 1]} : vector<2x32x1xf32> to vector<1x32x1xf32>
    %66 = vector.shape_cast %65 : vector<1x32x1xf32> to vector<32x1xf32>
    %cst_36 = arith.constant dense<0.000000e+00> : vector<2x1xf32>
    %67 = tpu.matmul %23, %66, %cst_36 {dimension_numbers = #tpu.dot_dimension_numbers<[1], [0], [0], [1], [0, 0, 1, 1], [], []>} : vector<2x32xf32>, vector<32x1xf32>, vector<2x1xf32> -> vector<2x1xf32>
    %68 = arith.addf %67, %24 : vector<2x1xf32>
    %69 = vector.shape_cast %68 : vector<2x1xf32> to vector<1x2x1xf32>
    %cst_37 = arith.constant dense<0.000000e+00> : vector<1xf32>
    %70 = vector.multi_reduction <add>, %69, %cst_37 [1, 2] : vector<1x2x1xf32> to vector<1xf32>
    %71 = vector.shape_cast %70 : vector<1xf32> to vector<1x1x1xf32>
    %72 = vector.extract %71[0, 0, 0] : f32 from vector<1x1x1xf32>
    %cst_38 = arith.constant 2.000000e+00 : f32
    %73 = arith.divf %72, %cst_38 : f32
    %74 = vector.broadcast %73 : f32 to vector<2x1xf32>
    %75 = arith.subf %68, %74 : vector<2x1xf32>
    %76 = arith.mulf %75, %75 : vector<2x1xf32>
    %77 = vector.shape_cast %76 : vector<2x1xf32> to vector<1x2x1xf32>
    %cst_39 = arith.constant dense<0.000000e+00> : vector<1xf32>
    %78 = vector.multi_reduction <add>, %77, %cst_39 [1, 2] : vector<1x2x1xf32> to vector<1xf32>
    %79 = vector.shape_cast %78 : vector<1xf32> to vector<1x1x1xf32>
    %80 = vector.extract %79[0, 0, 0] : f32 from vector<1x1x1xf32>
    %cst_40 = arith.constant 2.000000e+00 : f32
    %81 = arith.divf %80, %cst_40 : f32
    %82 = vector.broadcast %73 : f32 to vector<2x1xf32>
    %83 = arith.subf %68, %82 : vector<2x1xf32>
    %cst_41 = arith.constant 9.99999974E-6 : f32
    %84 = arith.addf %81, %cst_41 : f32
    %85 = math.rsqrt %84 : f32
    %86 = vector.broadcast %85 : f32 to vector<2x1xf32>
    %87 = arith.mulf %83, %86 : vector<2x1xf32>
    %88 = arith.mulf %87, %25 : vector<2x1xf32>
    %89 = arith.addf %88, %26 : vector<2x1xf32>
    %cst_42 = arith.constant 0.000000e+00 : f32
    %90 = vector.broadcast %cst_42 : f32 to vector<2x1xf32>
    %91 = arith.maximumf %89, %90 : vector<2x1xf32>
    %cst_43 = arith.constant dense<0.000000e+00> : vector<32x1xf32>
    %92 = tpu.matmul %27, %91, %cst_43 {dimension_numbers = #tpu.dot_dimension_numbers<[1], [0], [0], [1], [0, 0, 1, 1], [], []>} : vector<32x2xf32>, vector<2x1xf32>, vector<32x1xf32> -> vector<32x1xf32>
    %93 = arith.addf %92, %28 : vector<32x1xf32>
    %c1 = arith.constant 1 : index
    %c0_44 = arith.constant 0 : index
    %c0_45 = arith.constant 0 : index
    %94 = vector.load %arg1[%c1, %c0_44, %c0_45] : memref<2x32x256xf32, #tpu.memory_space<vmem>>, vector<1x32x256xf32>
    %95 = vector.shape_cast %94 : vector<1x32x256xf32> to vector<32x256xf32>
    %96 = vector.broadcast %93 : vector<32x1xf32> to vector<32x256xf32>
    %97 = arith.addf %95, %96 : vector<32x256xf32>
    %c1_46 = arith.constant 1 : index
    %c0_47 = arith.constant 0 : index
    %c0_48 = arith.constant 0 : index
    %98 = vector.load %arg10[%c1_46, %c0_47, %c0_48] : memref<2x32x256xf32, #tpu.memory_space<vmem>>, vector<1x32x256xf32>
    %99 = vector.shape_cast %98 : vector<1x32x256xf32> to vector<32x256xf32>
    %100 = vector.shape_cast %97 : vector<32x256xf32> to vector<1x32x256xf32>
    tpu.vector_store %arg10[%c1_46, %c0_47, %c0_48], %100 {strides = array<i32>} : memref<2x32x256xf32, #tpu.memory_space<vmem>>, vector<1x32x256xf32>,
    return
  }
  func.func @transform_0(%arg0: i32) -> (i32, i32, i32) {
    %c0_i32 = arith.constant 0 : i32
    %c0_i32_0 = arith.constant 0 : i32
    %c0_i32_1 = arith.constant 0 : i32
    return %arg0, %c0_i32, %c0_i32_0 : i32, i32, i32
  }
  func.func @transform_1(%arg0: i32) -> (i32, i32, i32) {
    %c0_i32 = arith.constant 0 : i32
    %c0_i32_0 = arith.constant 0 : i32
    %c0_i32_1 = arith.constant 0 : i32
    %c0_i32_2 = arith.constant 0 : i32
    return %c0_i32, %c0_i32_0, %c0_i32_1 : i32, i32, i32
  }
  func.func @transform_2(%arg0: i32) -> (i32, i32) {
    %c0_i32 = arith.constant 0 : i32
    %c0_i32_0 = arith.constant 0 : i32
    %c0_i32_1 = arith.constant 0 : i32
    return %c0_i32, %c0_i32_0 : i32, i32
  }
  func.func @transform_3(%arg0: i32) -> (i32, i32) {
    %c0_i32 = arith.constant 0 : i32
    %c0_i32_0 = arith.constant 0 : i32
    %c0_i32_1 = arith.constant 0 : i32
    return %c0_i32, %c0_i32_0 : i32, i32
  }
  func.func @transform_4(%arg0: i32) -> (i32, i32) {
    %c0_i32 = arith.constant 0 : i32
    %c0_i32_0 = arith.constant 0 : i32
    %c0_i32_1 = arith.constant 0 : i32
    return %c0_i32, %c0_i32_0 : i32, i32
  }
  func.func @transform_5(%arg0: i32) -> (i32, i32) {
    %c0_i32 = arith.constant 0 : i32
    %c0_i32_0 = arith.constant 0 : i32
    %c0_i32_1 = arith.constant 0 : i32
    return %c0_i32, %c0_i32_0 : i32, i32
  }
  func.func @transform_6(%arg0: i32) -> (i32, i32) {
    %c0_i32 = arith.constant 0 : i32
    %c0_i32_0 = arith.constant 0 : i32
    %c0_i32_1 = arith.constant 0 : i32
    return %c0_i32, %c0_i32_0 : i32, i32
  }
  func.func @transform_7(%arg0: i32) -> (i32, i32) {
    %c0_i32 = arith.constant 0 : i32
    %c0_i32_0 = arith.constant 0 : i32
    %c0_i32_1 = arith.constant 0 : i32
    return %c0_i32, %c0_i32_0 : i32, i32
  }
  func.func @transform_8(%arg0: i32) -> (i32, i32) {
    %c0_i32 = arith.constant 0 : i32
    %c0_i32_0 = arith.constant 0 : i32
    %c0_i32_1 = arith.constant 0 : i32
    return %c0_i32, %c0_i32_0 : i32, i32
  }
  func.func @transform_9(%arg0: i32) -> (i32, i32, i32) {
    %c0_i32 = arith.constant 0 : i32
    %c0_i32_0 = arith.constant 0 : i32
    %c0_i32_1 = arith.constant 0 : i32
    return %arg0, %c0_i32, %c0_i32_0 : i32, i32, i32
  }
}

</mosaic_0001>

<llo_original>
// kernel: tpu_custom_call.1
$region0: #{tpu_custom_call.1}
  #allocation0 [shape = 'u32[]', space=smem, size = 0x4, offset = 0x4, fixed_abs, tag = 'smem constant byte address 0x4 - core index']
  #allocation1 [shape = 'u32[144,128]{1,0:T(1,128)}', space=vmem, size = 0x12000, scoped, tag = 'internal scratch']
  #allocation2 [shape = 'f32[1,1]{1,0:T(1,128)S(6)}', space=smem, size = 0x200, scoped, tag = 'scoped memory for tpu_custom_call.1']
  %s0 = inlined_call_operand.hbm [shape: f32[2,32,256], index: 0, kind: input, shape index: {}]
  %s1 = inlined_call_operand.vmem [shape: f32[1,32,1], index: 1, kind: input, shape index: {}]
  %s2 = inlined_call_operand.<no memory space> [shape: f32[1,1], index: 2, kind: input, shape index: {}]
  %s3 = inlined_call_operand.vmem [shape: f32[2,32], index: 3, kind: input, shape index: {}]
  %s4 = inlined_call_operand.vmem [shape: f32[2,1], index: 4, kind: input, shape index: {}]
  %s5 = inlined_call_operand.vmem [shape: f32[2,1], index: 5, kind: input, shape index: {}]
  %s6 = inlined_call_operand.vmem [shape: f32[2,1], index: 6, kind: input, shape index: {}]
  %s7 = inlined_call_operand.vmem [shape: f32[32,2], index: 7, kind: input, shape index: {}]
  %s8 = inlined_call_operand.vmem [shape: f32[32,1], index: 8, kind: input, shape index: {}]
  %s9 = inlined_call_operand.hbm [shape: f32[2,32,256], index: 9, kind: output, shape index: {}]
  %s10 = sld [smem:[#allocation0]]
  $region50: #{tpu_custom_call.1} parent=0
    _
  %s12 = ssub.s32 1, %s10
  %s13 = scalar_select 0, %s12, %s10
  %14 = sst [smem:[#allocation2]] %s2
  $region1: #{tpu_custom_call.1} parent=0
    #allocation3 [shape = 'u8[65536]{0}', space=vmem, size = 0x10000, scoped, tag = 'input window, operand 0, single buffered']
    #allocation4 [shape = 's32[1]{0}', space=sflag, size = 0x4, scoped, tag = 'scoped memory for tpu_custom_call.1']
    #allocation5 [shape = 's32[1]{0}', space=sflag, size = 0x4, scoped, tag = 'scoped memory for tpu_custom_call.1']
    #allocation6 [shape = 'u8[65536]{0}', space=vmem, size = 0x10000, scoped, tag = 'output window, operand 0, single buffered']
    %15 = vsyncpa [#allocation4], 0
    %16 = vsyncpa [#allocation5], 0
    // Predicated region
    $region2: #{tpu_custom_call.1} parent=1 // pred_check
      _
    $region3: #{tpu_custom_call.1} parent=1 // pred_check_branch
      %18 = sbr.rel (0) target = $region5
    $region4: #{tpu_custom_call.1} parent=1 // pred_region
      %s20 = ssub.s32 2048, 2048
      %21 = vsyncadd [#allocation4], %s20
      %s22 = sshll.u32 [#allocation3], 4
      %s23 = int_to_ptr.vmem [resolvable:$true] %s22
      %28 = dma.hbm_to_vmem [thread:$0]  %s0, 2048, %s23, [#allocation4], 256, 256, 16
    $region5: #{tpu_custom_call.1} parent=1 // pred_fallthru
      _
    // Predicated region
    $region6: #{tpu_custom_call.1} parent=1 // pred_check
      _
    $region7: #{tpu_custom_call.1} parent=1 // pred_check_branch
      %30 = sbr.rel (0) target = $region9
    $region8: #{tpu_custom_call.1} parent=1 // pred_region
      _
    $region9: #{tpu_custom_call.1} parent=1 // pred_fallthru
      _
    // Predicated region
    $region10: #{tpu_custom_call.1} parent=1 // pred_check
      _
    $region11: #{tpu_custom_call.1} parent=1 // pred_check_branch
      %32 = sbr.rel (0) target = $region13
    $region12: #{tpu_custom_call.1} parent=1 // pred_region
      _
    $region13: #{tpu_custom_call.1} parent=1 // pred_fallthru
      _
    // Predicated region
    $region14: #{tpu_custom_call.1} parent=1 // pred_check
      _
    $region15: #{tpu_custom_call.1} parent=1 // pred_check_branch
      %34 = sbr.rel (0) target = $region17
    $region16: #{tpu_custom_call.1} parent=1 // pred_region
      _
    $region17: #{tpu_custom_call.1} parent=1 // pred_fallthru
      _
    // Predicated region
    $region18: #{tpu_custom_call.1} parent=1 // pred_check
      _
    $region19: #{tpu_custom_call.1} parent=1 // pred_check_branch
      %36 = sbr.rel (0) target = $region21
    $region20: #{tpu_custom_call.1} parent=1 // pred_region
      _
    $region21: #{tpu_custom_call.1} parent=1 // pred_fallthru
      _
    // Predicated region
    $region22: #{tpu_custom_call.1} parent=1 // pred_check
      _
    $region23: #{tpu_custom_call.1} parent=1 // pred_check_branch
      %38 = sbr.rel (0) target = $region25
    $region24: #{tpu_custom_call.1} parent=1 // pred_region
      _
    $region25: #{tpu_custom_call.1} parent=1 // pred_fallthru
      _
    // Predicated region
    $region26: #{tpu_custom_call.1} parent=1 // pred_check
      _
    $region27: #{tpu_custom_call.1} parent=1 // pred_check_branch
      %40 = sbr.rel (0) target = $region29
    $region28: #{tpu_custom_call.1} parent=1 // pred_region
      _
    $region29: #{tpu_custom_call.1} parent=1 // pred_fallthru
      _
    // Predicated region
    $region30: #{tpu_custom_call.1} parent=1 // pred_check
      _
    $region31: #{tpu_custom_call.1} parent=1 // pred_check_branch
      %42 = sbr.rel (0) target = $region33
    $region32: #{tpu_custom_call.1} parent=1 // pred_region
      _
    $region33: #{tpu_custom_call.1} parent=1 // pred_fallthru
      _
    // Predicated region
    $region34: #{tpu_custom_call.1} parent=1 // pred_check
      _
    $region35: #{tpu_custom_call.1} parent=1 // pred_check_branch
      %44 = sbr.rel (0) target = $region37
    $region36: #{tpu_custom_call.1} parent=1 // pred_region
      _
    $region37: #{tpu_custom_call.1} parent=1 // pred_fallthru
      _
    // Predicated region
    $region38: #{tpu_custom_call.1} parent=1 // pred_check
      _
    $region39: #{tpu_custom_call.1} parent=1 // pred_check_branch
      %46 = sbr.rel (0) target = $region41
    $region40: #{tpu_custom_call.1} parent=1 // pred_region
      %47 = dma.done [#allocation4], 2048
    $region41: #{tpu_custom_call.1} parent=1 // pred_fallthru
      _
    %v48 = vld [vmem:[#allocation3] sm:$0xff]
    %v49 = vld [vmem:[#allocation3 + $0x8] sm:$0xff]
    %v50 = vld [vmem:[#allocation3 + $0x10] sm:$0xff]
    %v51 = vld [vmem:[#allocation3 + $0x18] sm:$0xff]
    %v52 = vld [vmem:[#allocation3 + $0x20] sm:$0xff]
    %v53 = vld [vmem:[#allocation3 + $0x28] sm:$0xff]
    %v54 = vld [vmem:[#allocation3 + $0x30] sm:$0xff]
    %v55 = vld [vmem:[#allocation3 + $0x38] sm:$0xff]
    %v56 = vld [vmem:[#allocation3 + $0x40] sm:$0xff]
    %v57 = vld [vmem:[#allocation3 + $0x48] sm:$0xff]
    %v58 = vld [vmem:[#allocation3 + $0x50] sm:$0xff]
    %v59 = vld [vmem:[#allocation3 + $0x58] sm:$0xff]
    %v60 = vld [vmem:[#allocation3 + $0x60] sm:$0xff]
    %v61 = vld [vmem:[#allocation3 + $0x68] sm:$0xff]
    %v62 = vld [vmem:[#allocation3 + $0x70] sm:$0xff]
    %v63 = vld [vmem:[#allocation3 + $0x78] sm:$0xff]
    %v64 = vld [vmem:[%s1] sm:$0xff]
    %v65 = vld [vmem:[%s1 + $0x8] sm:$0xff]
    %v66 = vld [vmem:[%s1 + $0x10] sm:$0xff]
    %v67 = vld [vmem:[%s1 + $0x18] sm:$0xff]
    %69 = vset.pattern.permute.xlu0 0
    %70 = vperm.xlu0 %69, %v64
    %v71 = vpop.permute.xlu0 %70
    %74 = vset.pattern.permute.xlu0 0
    %75 = vperm.xlu0 %74, %v65
    %v76 = vpop.permute.xlu0 %75
    %79 = vset.pattern.permute.xlu0 0
    %80 = vperm.xlu0 %79, %v66
    %v81 = vpop.permute.xlu0 %80
    %84 = vset.pattern.permute.xlu0 0
    %85 = vperm.xlu0 %84, %v67
    %v86 = vpop.permute.xlu0 %85
    %v88 = vmul.f32 %v48, %v71
    %v89 = vmul.f32 %v49, %v71
    %v90 = vmul.f32 %v50, %v76
    %v91 = vmul.f32 %v51, %v76
    %v92 = vmul.f32 %v52, %v81
    %v93 = vmul.f32 %v53, %v81
    %v94 = vmul.f32 %v54, %v86
    %v95 = vmul.f32 %v55, %v86
    %v96 = vmul.f32 %v56, %v71
    %v97 = vmul.f32 %v57, %v71
    %v98 = vmul.f32 %v58, %v76
    %v99 = vmul.f32 %v59, %v76
    %v100 = vmul.f32 %v60, %v81
    %v101 = vmul.f32 %v61, %v81
    %v102 = vmul.f32 %v62, %v86
    %v103 = vmul.f32 %v63, %v86
    %v104 = vadd.f32 %v88, %v90
    %v105 = vadd.f32 %v104, %v92
    %v106 = vadd.f32 %v105, %v94
    %v107 = vrot.slane %v106, 4
    %v108 = vadd.f32 %v106, %v107
    %v109 = vrot.slane %v108, 2
    %v110 = vadd.f32 %v108, %v109
    %v111 = vrot.slane %v110, 1
    %v112 = vadd.f32 %v110, %v111
    %v113 = vadd.f32 %v89, %v91
    %v114 = vadd.f32 %v113, %v93
    %v115 = vadd.f32 %v114, %v95
    %v116 = vrot.slane %v115, 4
    %v117 = vadd.f32 %v115, %v116
    %v118 = vrot.slane %v117, 2
    %v119 = vadd.f32 %v117, %v118
    %v120 = vrot.slane %v119, 1
    %v121 = vadd.f32 %v119, %v120
    %v122 = vadd.f32 %v96, %v98
    %v123 = vadd.f32 %v122, %v100
    %v124 = vadd.f32 %v123, %v102
    %v125 = vrot.slane %v124, 4
    %v126 = vadd.f32 %v124, %v125
    %v127 = vrot.slane %v126, 2
    %v128 = vadd.f32 %v126, %v127
    %v129 = vrot.slane %v128, 1
    %v130 = vadd.f32 %v128, %v129
    %v131 = vadd.f32 %v97, %v99
    %v132 = vadd.f32 %v131, %v101
    %v133 = vadd.f32 %v132, %v103
    %v134 = vrot.slane %v133, 4
    %v135 = vadd.f32 %v133, %v134
    %v136 = vrot.slane %v135, 2
    %v137 = vadd.f32 %v135, %v136
    %v138 = vrot.slane %v137, 1
    %v139 = vadd.f32 %v137, %v138
    %s140 = sld [smem:[#allocation2]]
    %v141 = vstv %s140
    %v142 = vadd.f32 %v112, %v141
    %v143 = vadd.f32 %v121, %v141
    %v144 = vadd.f32 %v130, %v141
    %v145 = vadd.f32 %v139, %v141
    %v146 = vmax.f32 %v142, %v143
    %147 = vmax.xlane.f32.xlu0 %v146
    %v148 = vpop.xlane.xlu0 %147
    %v149 = vmax.f32 %v144, %v145
    %150 = vmax.xlane.f32.xlu0 %v149
    %v151 = vpop.xlane.xlu0 %150
    %v152 = vsub.f32 %v142, %v148
    %v153 = vsub.f32 %v143, %v148
    %v154 = vsub.f32 %v144, %v151
    %v155 = vsub.f32 %v145, %v151
    %v156 = vmul.f32 %v152, 1.442695
    %v157 = vpow.pop %v156
    %v158 = vmul.f32 %v153, 1.442695
    %v159 = vpow.pop %v158
    %v160 = vmul.f32 %v154, 1.442695
    %v161 = vpow.pop %v160
    %v162 = vmul.f32 %v155, 1.442695
    %v163 = vpow.pop %v162
    %v164 = vadd.f32 %v157, %v159
    %165 = vadd.xlane.f32.xlu0 %v164
    %v166 = vpop.xlane.xlu0 %165
    %v167 = vadd.f32 %v161, %v163
    %168 = vadd.xlane.f32.xlu0 %v167
    %v169 = vpop.xlane.xlu0 %168
    %v170 = vrcp.pop %v166
    %v171 = vrcp.pop %v169
    %v172 = vmul.f32 %v48, %v157
    %v173 = vmul.f32 %v49, %v159
    %v174 = vmul.f32 %v50, %v157
    %v175 = vmul.f32 %v51, %v159
    %v176 = vmul.f32 %v52, %v157
    %v177 = vmul.f32 %v53, %v159
    %v178 = vmul.f32 %v54, %v157
    %v179 = vmul.f32 %v55, %v159
    %v180 = vmul.f32 %v56, %v161
    %v181 = vmul.f32 %v57, %v163
    %v182 = vmul.f32 %v58, %v161
    %v183 = vmul.f32 %v59, %v163
    %v184 = vmul.f32 %v60, %v161
    %v185 = vmul.f32 %v61, %v163
    %v186 = vmul.f32 %v62, %v161
    %v187 = vmul.f32 %v63, %v163
    %v188 = vadd.f32 %v172, %v173
    %189 = vadd.xlane.f32.xlu0 %v188
    %v190 = vpop.xlane.xlu0 %189
    %v191 = vadd.f32 %v174, %v175
    %192 = vadd.xlane.f32.xlu0 %v191
    %v193 = vpop.xlane.xlu0 %192
    %v194 = vadd.f32 %v176, %v177
    %195 = vadd.xlane.f32.xlu0 %v194
    %v196 = vpop.xlane.xlu0 %195
    %v197 = vadd.f32 %v178, %v179
    %198 = vadd.xlane.f32.xlu0 %v197
    %v199 = vpop.xlane.xlu0 %198
    %v200 = vadd.f32 %v180, %v181
    %201 = vadd.xlane.f32.xlu0 %v200
    %v202 = vpop.xlane.xlu0 %201
    %v203 = vadd.f32 %v182, %v183
    %204 = vadd.xlane.f32.xlu0 %v203
    %v205 = vpop.xlane.xlu0 %204
    %v206 = vadd.f32 %v184, %v185
    %207 = vadd.xlane.f32.xlu0 %v206
    %v208 = vpop.xlane.xlu0 %207
    %v209 = vadd.f32 %v186, %v187
    %210 = vadd.xlane.f32.xlu0 %v209
    %v211 = vpop.xlane.xlu0 %210
    %v212 = vmul.f32 %v190, %v170
    %v213 = vmul.f32 %v193, %v170
    %v214 = vmul.f32 %v196, %v170
    %v215 = vmul.f32 %v199, %v170
    %v216 = vmul.f32 %v202, %v171
    %v217 = vmul.f32 %v205, %v171
    %v218 = vmul.f32 %v208, %v171
    %v219 = vmul.f32 %v211, %v171
    %v220 = vld [vmem:[%s3] sm:$0x3]
    %v221 = vld [vmem:[%s4] sm:$0x3]
    %v222 = vld [vmem:[%s5] sm:$0x3]
    %v223 = vld [vmem:[%s6] sm:$0x3]
    %v224 = vld [vmem:[%s7] sm:$0xff]
    %v225 = vld [vmem:[%s7 + $0x8] sm:$0xff]
    %v226 = vld [vmem:[%s7 + $0x10] sm:$0xff]
    %v227 = vld [vmem:[%s7 + $0x18] sm:$0xff]
    %v228 = vld [vmem:[%s8] sm:$0xff]
    %v229 = vld [vmem:[%s8 + $0x8] sm:$0xff]
    %v230 = vld [vmem:[%s8 + $0x10] sm:$0xff]
    %v231 = vld [vmem:[%s8 + $0x18] sm:$0xff]
    %vm232 = vcmask 261120
    %v234 = vsel %vm232, %v220, 0
    %236 = vmatprep.subr.mxu0 0.0
    %237 = vmatpush1.msra.mxu0 0.0
    %238 = vmatprep.subr.mxu0 0.0
    %239 = vmatpush1.msra.mxu0 0.0
    %240 = vmatprep.subr.mxu0 0.0
    %241 = vmatpush1.msra.mxu0 0.0
    %242 = vmatprep.subr.mxu0 0.0
    %243 = vmatpush1.msra.mxu0 0.0
    %244 = vmatprep.subr.mxu0 0.0
    %245 = vmatpush1.msra.mxu0 0.0
    %246 = vmatprep.subr.mxu0 0.0
    %247 = vmatpush1.msra.mxu0 0.0
    %248 = vmatprep.subr.mxu0 0.0
    %249 = vmatpush1.msra.mxu0 0.0
    %250 = vmatprep.subr.mxu0 0.0
    %251 = vmatpush1.msra.mxu0 0.0
    %252 = vmatprep.subr.mxu0 0.0
    %253 = vmatpush1.msra.mxu0 0.0
    %254 = vmatprep.subr.mxu0 0.0
    %255 = vmatpush1.msra.mxu0 0.0
    %256 = vmatprep.subr.mxu0 0.0
    %257 = vmatpush1.msra.mxu0 0.0
    %258 = vmatprep.subr.mxu0 0.0
    %259 = vmatpush1.msra.mxu0 0.0
    %260 = vmatprep.subr.mxu0 0.0
    %261 = vmatpush1.msra.mxu0 %v215
    %262 = vmatprep.subr.mxu0 0.0
    %263 = vmatpush1.msra.mxu0 %v214
    %264 = vmatprep.subr.mxu0 0.0
    %265 = vmatpush1.msra.mxu0 %v213
    %266 = vmatprep.subr.mxu0 0.0
    %267 = vmatpush1.msra.mxu0 %v212
    %268 = vmatprep.subr.mxu0 0.0
    %269 = vmatpush2.msra.mxu0 0.0
    %270 = vmatprep.subr.mxu0 0.0
    %271 = vmatpush2.msra.mxu0 0.0
    %272 = vmatprep.subr.mxu0 0.0
    %273 = vmatpush2.msra.mxu0 0.0
    %274 = vmatprep.subr.mxu0 0.0
    %275 = vmatpush2.msra.mxu0 0.0
    %276 = vmatprep.subr.mxu0 0.0
    %277 = vmatpush2.msra.mxu0 0.0
    %278 = vmatprep.subr.mxu0 0.0
    %279 = vmatpush2.msra.mxu0 0.0
    %280 = vmatprep.subr.mxu0 0.0
    %281 = vmatpush2.msra.mxu0 0.0
    %282 = vmatprep.subr.mxu0 0.0
    %283 = vmatpush2.msra.mxu0 0.0
    %284 = vmatprep.subr.mxu0 0.0
    %285 = vmatpush2.msra.mxu0 0.0
    %286 = vmatprep.subr.mxu0 0.0
    %287 = vmatpush2.msra.mxu0 0.0
    %288 = vmatprep.subr.mxu0 0.0
    %289 = vmatpush2.msra.mxu0 0.0
    %290 = vmatprep.subr.mxu0 0.0
    %291 = vmatpush2.msra.mxu0 0.0
    %292 = vmatprep.subr.mxu0 0.0
    %293 = vmatpush2.msra.mxu0 0.0
    %294 = vmatprep.subr.mxu0 0.0
    %295 = vmatpush2.msra.mxu0 0.0
    %296 = vmatprep.subr.mxu0 0.0
    %297 = vmatpush2.msra.mxu0 0.0
    %298 = vmatprep.subr.mxu0 0.0
    %299 = vmatpush2.msra.mxu0 0.0
    %300 = vmatprep.mubr.f32.mxu0 0.0
    %301 = vmatmul.mubr.f32.gmra.mxu0 %v234
    %v302 = vpop.f32.mrf.mxu0
    %v303 = vadd.f32 %v221, %v302
    %v304 = vpop.f32.mrf.mxu0
    %305 = vdwg.mxu0
    %vm306 = vcmask 1024
    %v307 = vsel %vm306, %v303, 0.0
    %308 = vadd.xlane.f32.xlu0 %v307
    %v309 = vpop.xlane.xlu0 %308
    %v310 = vrot.slane %v309, 4
    %v311 = vadd.f32 %v309, %v310
    %v312 = vrot.slane %v311, 2
    %v313 = vadd.f32 %v311, %v312
    %v314 = vrot.slane %v313, 1
    %v315 = vadd.f32 %v313, %v314
    %s316 = vtos %v315
    %v317 = vrcp.pop 2.0
    %s318 = vtos %v317
    %s319 = smul.f32 %s316, %s318
    %v320 = vstv %s319
    %v321 = vsub.f32 %v303, %v320
    %v322 = vmul.f32 %v321, %v321
    %v323 = vsel %vm306, %v322, 0.0
    %324 = vadd.xlane.f32.xlu0 %v323
    %v325 = vpop.xlane.xlu0 %324
    %v326 = vrot.slane %v325, 4
    %v327 = vadd.f32 %v325, %v326
    %v328 = vrot.slane %v327, 2
    %v329 = vadd.f32 %v327, %v328
    %v330 = vrot.slane %v329, 1
    %v331 = vadd.f32 %v329, %v330
    %s332 = vtos %v331
    %v333 = vrcp.pop 2.0
    %s334 = vtos %v333
    %s335 = smul.f32 %s332, %s334
    %s336 = sadd.f32 %s335, 1e-05
    %v337 = vstv %s336
    %v338 = vrsqrt.pop %v337
    %s339 = vtos %v338
    %v340 = vstv %s339
    %v341 = vmul.f32 %v321, %v340
    %v342 = vmul.f32 %v341, %v222
    %v343 = vadd.f32 %v342, %v223
    %v344 = vmax.f32 %v343, 0.0
    %vm345 = vcmask 15360
    %v347 = vsel %vm345, %v224, 0
    %v350 = vsel %vm345, %v225, 0
    %v353 = vsel %vm345, %v226, 0
    %v356 = vsel %vm345, %v227, 0
    %vm358 = vcmask 1041408
    %v360 = vsel %vm358, %v344, 0
    %362 = vmatprep.subr.mxu0 0.0
    %363 = vmatpush1.msra.mxu0 0.0
    %364 = vmatprep.subr.mxu0 0.0
    %365 = vmatpush1.msra.mxu0 0.0
    %366 = vmatprep.subr.mxu0 0.0
    %367 = vmatpush1.msra.mxu0 0.0
    %368 = vmatprep.subr.mxu0 0.0
    %369 = vmatpush1.msra.mxu0 0.0
    %370 = vmatprep.subr.mxu0 0.0
    %371 = vmatpush1.msra.mxu0 0.0
    %372 = vmatprep.subr.mxu0 0.0
    %373 = vmatpush1.msra.mxu0 0.0
    %374 = vmatprep.subr.mxu0 0.0
    %375 = vmatpush1.msra.mxu0 0.0
    %376 = vmatprep.subr.mxu0 0.0
    %377 = vmatpush1.msra.mxu0 0.0
    %378 = vmatprep.subr.mxu0 0.0
    %379 = vmatpush1.msra.mxu0 0.0
    %380 = vmatprep.subr.mxu0 0.0
    %381 = vmatpush1.msra.mxu0 0.0
    %382 = vmatprep.subr.mxu0 0.0
    %383 = vmatpush1.msra.mxu0 0.0
    %384 = vmatprep.subr.mxu0 0.0
    %385 = vmatpush1.msra.mxu0 0.0
    %386 = vmatprep.subr.mxu0 0.0
    %387 = vmatpush1.msra.mxu0 0.0
    %388 = vmatprep.subr.mxu0 0.0
    %389 = vmatpush1.msra.mxu0 0.0
    %390 = vmatprep.subr.mxu0 0.0
    %391 = vmatpush1.msra.mxu0 0.0
    %392 = vmatprep.subr.mxu0 0.0
    %393 = vmatpush1.msra.mxu0 %v360
    %394 = vmatprep.subr.mxu0 0.0
    %395 = vmatpush2.msra.mxu0 0.0
    %396 = vmatprep.subr.mxu0 0.0
    %397 = vmatpush2.msra.mxu0 0.0
    %398 = vmatprep.subr.mxu0 0.0
    %399 = vmatpush2.msra.mxu0 0.0
    %400 = vmatprep.subr.mxu0 0.0
    %401 = vmatpush2.msra.mxu0 0.0
    %402 = vmatprep.subr.mxu0 0.0
    %403 = vmatpush2.msra.mxu0 0.0
    %404 = vmatprep.subr.mxu0 0.0
    %405 = vmatpush2.msra.mxu0 0.0
    %406 = vmatprep.subr.mxu0 0.0
    %407 = vmatpush2.msra.mxu0 0.0
    %408 = vmatprep.subr.mxu0 0.0
    %409 = vmatpush2.msra.mxu0 0.0
    %410 = vmatprep.subr.mxu0 0.0
    %411 = vmatpush2.msra.mxu0 0.0
    %412 = vmatprep.subr.mxu0 0.0
    %413 = vmatpush2.msra.mxu0 0.0
    %414 = vmatprep.subr.mxu0 0.0
    %415 = vmatpush2.msra.mxu0 0.0
    %416 = vmatprep.subr.mxu0 0.0
    %417 = vmatpush2.msra.mxu0 0.0
    %418 = vmatprep.subr.mxu0 0.0
    %419 = vmatpush2.msra.mxu0 0.0
    %420 = vmatprep.subr.mxu0 0.0
    %421 = vmatpush2.msra.mxu0 0.0
    %422 = vmatprep.subr.mxu0 0.0
    %423 = vmatpush2.msra.mxu0 0.0
    %424 = vmatprep.subr.mxu0 0.0
    %425 = vmatpush2.msra.mxu0 0.0
    %426 = vmatprep.mubr.f32.mxu0 0.0
    %427 = vmatmul.mubr.f32.gmra.mxu0 %v347
    %v428 = vpop.f32.mrf.mxu0
    %v429 = vadd.f32 %v228, %v428
    %v430 = vpop.f32.mrf.mxu0
    %431 = vmatprep.mubr.f32.mxu0 0.0
    %432 = vmatmul.mubr.f32.gmra.mxu0 %v350
    %v433 = vpop.f32.mrf.mxu0
    %v434 = vadd.f32 %v229, %v433
    %v435 = vpop.f32.mrf.mxu0
    %436 = vmatprep.mubr.f32.mxu0 0.0
    %437 = vmatmul.mubr.f32.gmra.mxu0 %v353
    %v438 = vpop.f32.mrf.mxu0
    %v439 = vadd.f32 %v230, %v438
    %v440 = vpop.f32.mrf.mxu0
    %441 = vmatprep.mubr.f32.mxu0 0.0
    %442 = vmatmul.mubr.f32.gmra.mxu0 %v356
    %v443 = vpop.f32.mrf.mxu0
    %v444 = vadd.f32 %v231, %v443
    %v445 = vpop.f32.mrf.mxu0
    %446 = vdwg.mxu0
    %v447 = vld [vmem:[#allocation3] sm:$0xff]
    %v448 = vld [vmem:[#allocation3 + $0x8] sm:$0xff]
    %v449 = vld [vmem:[#allocation3 + $0x10] sm:$0xff]
    %v450 = vld [vmem:[#allocation3 + $0x18] sm:$0xff]
    %v451 = vld [vmem:[#allocation3 + $0x20] sm:$0xff]
    %v452 = vld [vmem:[#allocation3 + $0x28] sm:$0xff]
    %v453 = vld [vmem:[#allocation3 + $0x30] sm:$0xff]
    %v454 = vld [vmem:[#allocation3 + $0x38] sm:$0xff]
    %456 = vset.pattern.permute.xlu0 0
    %457 = vperm.xlu0 %456, %v429
    %v458 = vpop.permute.xlu0 %457
    %461 = vset.pattern.permute.xlu0 0
    %462 = vperm.xlu0 %461, %v434
    %v463 = vpop.permute.xlu0 %462
    %466 = vset.pattern.permute.xlu0 0
    %467 = vperm.xlu0 %466, %v439
    %v468 = vpop.permute.xlu0 %467
    %471 = vset.pattern.permute.xlu0 0
    %472 = vperm.xlu0 %471, %v444
    %v473 = vpop.permute.xlu0 %472
    %v475 = vadd.f32 %v447, %v458
    %v476 = vadd.f32 %v448, %v458
    %v477 = vadd.f32 %v449, %v463
    %v478 = vadd.f32 %v450, %v463
    %v479 = vadd.f32 %v451, %v468
    %v480 = vadd.f32 %v452, %v468
    %v481 = vadd.f32 %v453, %v473
    %v482 = vadd.f32 %v454, %v473
    %483 = vst [vmem:[#allocation6] sm:$0xff] %v475
    %484 = vst [vmem:[#allocation6 + $0x8] sm:$0xff] %v476
    %485 = vst [vmem:[#allocation6 + $0x10] sm:$0xff] %v477
    %486 = vst [vmem:[#allocation6 + $0x18] sm:$0xff] %v478
    %487 = vst [vmem:[#allocation6 + $0x20] sm:$0xff] %v479
    %488 = vst [vmem:[#allocation6 + $0x28] sm:$0xff] %v480
    %489 = vst [vmem:[#allocation6 + $0x30] sm:$0xff] %v481
    %490 = vst [vmem:[#allocation6 + $0x38] sm:$0xff] %v482
    %491 = vmatprep.subr.mxu0 0.0
    %492 = vmatpush1.msra.mxu0 0.0
    %493 = vmatprep.subr.mxu0 0.0
    %494 = vmatpush1.msra.mxu0 0.0
    %495 = vmatprep.subr.mxu0 0.0
    %496 = vmatpush1.msra.mxu0 0.0
    %497 = vmatprep.subr.mxu0 0.0
    %498 = vmatpush1.msra.mxu0 0.0
    %499 = vmatprep.subr.mxu0 0.0
    %500 = vmatpush1.msra.mxu0 0.0
    %501 = vmatprep.subr.mxu0 0.0
    %502 = vmatpush1.msra.mxu0 0.0
    %503 = vmatprep.subr.mxu0 0.0
    %504 = vmatpush1.msra.mxu0 0.0
    %505 = vmatprep.subr.mxu0 0.0
    %506 = vmatpush1.msra.mxu0 0.0
    %507 = vmatprep.subr.mxu0 0.0
    %508 = vmatpush1.msra.mxu0 0.0
    %509 = vmatprep.subr.mxu0 0.0
    %510 = vmatpush1.msra.mxu0 0.0
    %511 = vmatprep.subr.mxu0 0.0
    %512 = vmatpush1.msra.mxu0 0.0
    %513 = vmatprep.subr.mxu0 0.0
    %514 = vmatpush1.msra.mxu0 0.0
    %515 = vmatprep.subr.mxu0 0.0
    %516 = vmatpush1.msra.mxu0 %v219
    %517 = vmatprep.subr.mxu0 0.0
    %518 = vmatpush1.msra.mxu0 %v218
    %519 = vmatprep.subr.mxu0 0.0
    %520 = vmatpush1.msra.mxu0 %v217
    %521 = vmatprep.subr.mxu0 0.0
    %522 = vmatpush1.msra.mxu0 %v216
    %523 = vmatprep.subr.mxu0 0.0
    %524 = vmatpush2.msra.mxu0 0.0
    %525 = vmatprep.subr.mxu0 0.0
    %526 = vmatpush2.msra.mxu0 0.0
    %527 = vmatprep.subr.mxu0 0.0
    %528 = vmatpush2.msra.mxu0 0.0
    %529 = vmatprep.subr.mxu0 0.0
    %530 = vmatpush2.msra.mxu0 0.0
    %531 = vmatprep.subr.mxu0 0.0
    %532 = vmatpush2.msra.mxu0 0.0
    %533 = vmatprep.subr.mxu0 0.0
    %534 = vmatpush2.msra.mxu0 0.0
    %535 = vmatprep.subr.mxu0 0.0
    %536 = vmatpush2.msra.mxu0 0.0
    %537 = vmatprep.subr.mxu0 0.0
    %538 = vmatpush2.msra.mxu0 0.0
    %539 = vmatprep.subr.mxu0 0.0
    %540 = vmatpush2.msra.mxu0 0.0
    %541 = vmatprep.subr.mxu0 0.0
    %542 = vmatpush2.msra.mxu0 0.0
    %543 = vmatprep.subr.mxu0 0.0
    %544 = vmatpush2.msra.mxu0 0.0
    %545 = vmatprep.subr.mxu0 0.0
    %546 = vmatpush2.msra.mxu0 0.0
    %547 = vmatprep.subr.mxu0 0.0
    %548 = vmatpush2.msra.mxu0 0.0
    %549 = vmatprep.subr.mxu0 0.0
    %550 = vmatpush2.msra.mxu0 0.0
    %551 = vmatprep.subr.mxu0 0.0
    %552 = vmatpush2.msra.mxu0 0.0
    %553 = vmatprep.subr.mxu0 0.0
    %554 = vmatpush2.msra.mxu0 0.0
    %555 = vmatprep.mubr.f32.mxu0 0.0
    %556 = vmatmul.mubr.f32.gmra.mxu0 %v234
    %v557 = vpop.f32.mrf.mxu0
    %v558 = vadd.f32 %v221, %v557
    %v559 = vpop.f32.mrf.mxu0
    %560 = vdwg.mxu0
    %v561 = vsel %vm306, %v558, 0.0
    %562 = vadd.xlane.f32.xlu0 %v561
    %v563 = vpop.xlane.xlu0 %562
    %v564 = vrot.slane %v563, 4
    %v565 = vadd.f32 %v563, %v564
    %v566 = vrot.slane %v565, 2
    %v567 = vadd.f32 %v565, %v566
    %v568 = vrot.slane %v567, 1
    %v569 = vadd.f32 %v567, %v568
    %s570 = vtos %v569
    %v571 = vrcp.pop 2.0
    %s572 = vtos %v571
    %s573 = smul.f32 %s570, %s572
    %v574 = vstv %s573
    %v575 = vsub.f32 %v558, %v574
    %v576 = vmul.f32 %v575, %v575
    %v577 = vsel %vm306, %v576, 0.0
    %578 = vadd.xlane.f32.xlu0 %v577
    %v579 = vpop.xlane.xlu0 %578
    %v580 = vrot.slane %v579, 4
    %v581 = vadd.f32 %v579, %v580
    %v582 = vrot.slane %v581, 2
    %v583 = vadd.f32 %v581, %v582
    %v584 = vrot.slane %v583, 1
    %v585 = vadd.f32 %v583, %v584
    %s586 = vtos %v585
    %v587 = vrcp.pop 2.0
    %s588 = vtos %v587
    %s589 = smul.f32 %s586, %s588
    %s590 = sadd.f32 %s589, 1e-05
    %v591 = vstv %s590
    %v592 = vrsqrt.pop %v591
    %s593 = vtos %v592
    %v594 = vstv %s593
    %v595 = vmul.f32 %v575, %v594
    %v596 = vmul.f32 %v595, %v222
    %v597 = vadd.f32 %v596, %v223
    %v598 = vmax.f32 %v597, 0.0
    %v600 = vsel %vm358, %v598, 0
    %602 = vmatprep.subr.mxu0 0.0
    %603 = vmatpush1.msra.mxu0 0.0
    %604 = vmatprep.subr.mxu0 0.0
    %605 = vmatpush1.msra.mxu0 0.0
    %606 = vmatprep.subr.mxu0 0.0
    %607 = vmatpush1.msra.mxu0 0.0
    %608 = vmatprep.subr.mxu0 0.0
    %609 = vmatpush1.msra.mxu0 0.0
    %610 = vmatprep.subr.mxu0 0.0
    %611 = vmatpush1.msra.mxu0 0.0
    %612 = vmatprep.subr.mxu0 0.0
    %613 = vmatpush1.msra.mxu0 0.0
    %614 = vmatprep.subr.mxu0 0.0
    %615 = vmatpush1.msra.mxu0 0.0
    %616 = vmatprep.subr.mxu0 0.0
    %617 = vmatpush1.msra.mxu0 0.0
    %618 = vmatprep.subr.mxu0 0.0
    %619 = vmatpush1.msra.mxu0 0.0
    %620 = vmatprep.subr.mxu0 0.0
    %621 = vmatpush1.msra.mxu0 0.0
    %622 = vmatprep.subr.mxu0 0.0
    %623 = vmatpush1.msra.mxu0 0.0
    %624 = vmatprep.subr.mxu0 0.0
    %625 = vmatpush1.msra.mxu0 0.0
    %626 = vmatprep.subr.mxu0 0.0
    %627 = vmatpush1.msra.mxu0 0.0
    %628 = vmatprep.subr.mxu0 0.0
    %629 = vmatpush1.msra.mxu0 0.0
    %630 = vmatprep.subr.mxu0 0.0
    %631 = vmatpush1.msra.mxu0 0.0
    %632 = vmatprep.subr.mxu0 0.0
    %633 = vmatpush1.msra.mxu0 %v600
    %634 = vmatprep.subr.mxu0 0.0
    %635 = vmatpush2.msra.mxu0 0.0
    %636 = vmatprep.subr.mxu0 0.0
    %637 = vmatpush2.msra.mxu0 0.0
    %638 = vmatprep.subr.mxu0 0.0
    %639 = vmatpush2.msra.mxu0 0.0
    %640 = vmatprep.subr.mxu0 0.0
    %641 = vmatpush2.msra.mxu0 0.0
    %642 = vmatprep.subr.mxu0 0.0
    %643 = vmatpush2.msra.mxu0 0.0
    %644 = vmatprep.subr.mxu0 0.0
    %645 = vmatpush2.msra.mxu0 0.0
    %646 = vmatprep.subr.mxu0 0.0
    %647 = vmatpush2.msra.mxu0 0.0
    %648 = vmatprep.subr.mxu0 0.0
    %649 = vmatpush2.msra.mxu0 0.0
    %650 = vmatprep.subr.mxu0 0.0
    %651 = vmatpush2.msra.mxu0 0.0
    %652 = vmatprep.subr.mxu0 0.0
    %653 = vmatpush2.msra.mxu0 0.0
    %654 = vmatprep.subr.mxu0 0.0
    %655 = vmatpush2.msra.mxu0 0.0
    %656 = vmatprep.subr.mxu0 0.0
    %657 = vmatpush2.msra.mxu0 0.0
    %658 = vmatprep.subr.mxu0 0.0
    %659 = vmatpush2.msra.mxu0 0.0
    %660 = vmatprep.subr.mxu0 0.0
    %661 = vmatpush2.msra.mxu0 0.0
    %662 = vmatprep.subr.mxu0 0.0
    %663 = vmatpush2.msra.mxu0 0.0
    %664 = vmatprep.subr.mxu0 0.0
    %665 = vmatpush2.msra.mxu0 0.0
    %666 = vmatprep.mubr.f32.mxu0 0.0
    %667 = vmatmul.mubr.f32.gmra.mxu0 %v347
    %v668 = vpop.f32.mrf.mxu0
    %v669 = vadd.f32 %v228, %v668
    %v670 = vpop.f32.mrf.mxu0
    %671 = vmatprep.mubr.f32.mxu0 0.0
    %672 = vmatmul.mubr.f32.gmra.mxu0 %v350
    %v673 = vpop.f32.mrf.mxu0
    %v674 = vadd.f32 %v229, %v673
    %v675 = vpop.f32.mrf.mxu0
    %676 = vmatprep.mubr.f32.mxu0 0.0
    %677 = vmatmul.mubr.f32.gmra.mxu0 %v353
    %v678 = vpop.f32.mrf.mxu0
    %v679 = vadd.f32 %v230, %v678
    %v680 = vpop.f32.mrf.mxu0
    %681 = vmatprep.mubr.f32.mxu0 0.0
    %682 = vmatmul.mubr.f32.gmra.mxu0 %v356
    %v683 = vpop.f32.mrf.mxu0
    %v684 = vadd.f32 %v231, %v683
    %v685 = vpop.f32.mrf.mxu0
    %686 = vdwg.mxu0
    %s687 = scalar_lea.vmem [#allocation3], 64
    %v688 = vld [vmem:[%s687] sm:$0xff]
    %v689 = vld [vmem:[%s687 + $0x8] sm:$0xff]
    %v690 = vld [vmem:[%s687 + $0x10] sm:$0xff]
    %v691 = vld [vmem:[%s687 + $0x18] sm:$0xff]
    %v692 = vld [vmem:[%s687 + $0x20] sm:$0xff]
    %v693 = vld [vmem:[%s687 + $0x28] sm:$0xff]
    %v694 = vld [vmem:[%s687 + $0x30] sm:$0xff]
    %v695 = vld [vmem:[%s687 + $0x38] sm:$0xff]
    %697 = vset.pattern.permute.xlu0 0
    %698 = vperm.xlu0 %697, %v669
    %v699 = vpop.permute.xlu0 %698
    %702 = vset.pattern.permute.xlu0 0
    %703 = vperm.xlu0 %702, %v674
    %v704 = vpop.permute.xlu0 %703
    %707 = vset.pattern.permute.xlu0 0
    %708 = vperm.xlu0 %707, %v679
    %v709 = vpop.permute.xlu0 %708
    %712 = vset.pattern.permute.xlu0 0
    %713 = vperm.xlu0 %712, %v684
    %v714 = vpop.permute.xlu0 %713
    %v716 = vadd.f32 %v688, %v699
    %v717 = vadd.f32 %v689, %v699
    %v718 = vadd.f32 %v690, %v704
    %v719 = vadd.f32 %v691, %v704
    %v720 = vadd.f32 %v692, %v709
    %v721 = vadd.f32 %v693, %v709
    %v722 = vadd.f32 %v694, %v714
    %v723 = vadd.f32 %v695, %v714
    %s724 = scalar_lea.vmem [#allocation6], 64
    %725 = vst [vmem:[%s724] sm:$0xff] %v716
    %726 = vst [vmem:[%s724 + $0x8] sm:$0xff] %v717
    %727 = vst [vmem:[%s724 + $0x10] sm:$0xff] %v718
    %728 = vst [vmem:[%s724 + $0x18] sm:$0xff] %v719
    %729 = vst [vmem:[%s724 + $0x20] sm:$0xff] %v720
    %730 = vst [vmem:[%s724 + $0x28] sm:$0xff] %v721
    %731 = vst [vmem:[%s724 + $0x30] sm:$0xff] %v722
    %732 = vst [vmem:[%s724 + $0x38] sm:$0xff] %v723
    // Predicated region
    $region42: #{tpu_custom_call.1} parent=1 // pred_check
      _
    $region43: #{tpu_custom_call.1} parent=1 // pred_check_branch
      %734 = sbr.rel (0) target = $region45
    $region44: #{tpu_custom_call.1} parent=1 // pred_region
      %s736 = ssub.s32 2048, 2048
      %737 = vsyncadd [#allocation5], %s736
      %s738 = sshll.u32 [#allocation6], 4
      %s739 = int_to_ptr.vmem [resolvable:$true] %s738
      %744 = dma.vmem_to_hbm [thread:$0]  %s739, 2048, %s9, [#allocation5], 256, 256, 16
    $region45: #{tpu_custom_call.1} parent=1 // pred_fallthru
      _
    // Predicated region
    $region46: #{tpu_custom_call.1} parent=1 // pred_check
      _
    $region47: #{tpu_custom_call.1} parent=1 // pred_check_branch
      %746 = sbr.rel (0) target = $region49
    $region48: #{tpu_custom_call.1} parent=1 // pred_region
      %747 = dma.done [#allocation5], 2048
    $region49: #{tpu_custom_call.1} parent=1 // pred_fallthru
      _
    %748 = vsyncpa [#allocation4], 1
    %749 = vsyncpa [#allocation5], 1

</llo_original>
